<compile_context>
chip_gen: v6e
topology: v6e:2x2x1
jax: 0.10.0
libtpu: 0.0.40
codegen_flags: <defaults>
</compile_context>

<pallas_src>
import jax
import jax.numpy as jnp
from jax.experimental import pallas as pl
from jax.experimental.pallas import tpu as pltpu


def _make_fusion_conv_kernel(H, W, RB, PAD):
    """Builds the kernel for spatial size (H, W), row-block RB rows, halo PAD lanes."""
    HW = H * W

    def kernel(ti_ref, ci_ref, w_ref, b_ref, m_ref, o_ref, xext_ref):
        # ti_ref, ci_ref : (RB, H*W)        lane-dense inputs for G batch elements
        # w_ref          : (9, RB, RB)      per-tap block-diagonal weights kron(I_G, W_tap)
        # b_ref          : (RB, 1)          conv bias, tiled per batch element
        # m_ref          : (2, H*W)         0/1 edge masks (col != 0, col != W-1)
        # o_ref          : (RB, H*W)        output row-block
        # xext_ref       : (RB, 2*PAD+H*W)  zero-extended scratch (in-kernel padding)

        # Fused hadamard product, lane-dense (RB, H*W).
        x = (ti_ref[...] * ci_ref[...]).astype(jnp.float32)

        # In-kernel zero padding: zero only the two lane-aligned halo tiles, then one
        # store of the product.  Every conv tap below is a single static lane-slice.
        xext_ref[:, :PAD] = jnp.zeros((RB, PAD), jnp.float32)
        xext_ref[:, PAD + HW:] = jnp.zeros((RB, PAD), jnp.float32)
        xext_ref[:, PAD:PAD + HW] = x

        # Edge masks (kill horizontal row-wrap of the flattened spatial axis).
        # Broadcast ONCE per step; applied with jnp.where so inf/NaN can't leak.
        not_left = jnp.broadcast_to(m_ref[0:1, :] != 0.0, (RB, HW))   # valid for dx = -1
        not_right = jnp.broadcast_to(m_ref[1:2, :] != 0.0, (RB, HW))  # valid for dx = +1
        zeros = jnp.zeros((RB, HW), jnp.float32)

        # Bias folded into the accumulator init.
        acc = jnp.broadcast_to(b_ref[...], (RB, HW)).astype(jnp.float32)

        # 3x3 conv as 9 shifted taps; each tap is one small block-diagonal MXU dot
        # (channel mixing on the otherwise-idle MXU instead of VPU/XLU broadcasts).
        for ky in range(3):
            for kx in range(3):
                dy, dx = ky - 1, kx - 1
                start = PAD + dy * W + dx
                patch = xext_ref[:, start:start + HW]                 # (RB, H*W)
                if dx == -1:
                    patch = jnp.where(not_left, patch, zeros)
                elif dx == 1:
                    patch = jnp.where(not_right, patch, zeros)
                acc = acc + jnp.dot(w_ref[ky * 3 + kx], patch,
                                    preferred_element_type=jnp.float32)

        o_ref[...] = acc.astype(o_ref.dtype)

    return kernel


@jax.jit
def multimodal_fusion(ti_nchw, ci_nchw, weight_oihw, bias):
    """Matches MultimodalFusion.forward: conv3x3(ti * ci, padding=1) + bias, NCHW in/out."""
    N, C, H, W = ti_nchw.shape
    HW = H * W

    # Group whole batch elements per grid step so each row-block has >= 8 sublanes
    # (full (8,128) vreg tiles) when C < 8.
    G = 1
    if C < 8:
        g = min(N, -(-8 // C))          # ceil(8 / C), capped at N
        while N % g != 0:
            g -= 1
        G = g
    RB = G * C                           # rows per grid step
    NB = N // G                          # grid steps

    # Lane-aligned halo; must cover W + 1 elements of spill on each side.
    PAD = ((W + 1 + 127) // 128) * 128
    EXT = HW + 2 * PAD

    # Free reshapes (contiguous trailing dims merged) -- no transposes, no pads.
    ti2 = ti_nchw.reshape(N * C, HW)
    ci2 = ci_nchw.reshape(N * C, HW)

    # Per-tap block-diagonal weight: wbd[tap] = kron(I_G, weight[:, :, ky, kx]),
    # so one (RB,RB) @ (RB,HW) dot per tap mixes channels independently per batch element.
    wt = jnp.transpose(weight_oihw, (2, 3, 0, 1)).reshape(9, C, C)    # (tap, cout, cin)
    eye_g = jnp.eye(G, dtype=weight_oihw.dtype)
    wbd = jnp.einsum('gh,tab->tgahb', eye_g, wt).reshape(9, RB, RB)

    # Bias tiled per batch element in the row-block.
    b2 = jnp.tile(bias, G).reshape(RB, 1)

    # 0/1 masks killing horizontal row-wrap of the flattened spatial axis.
    col = jnp.arange(HW, dtype=jnp.int32) % W
    masks = jnp.stack([(col != 0), (col != W - 1)]).astype(jnp.float32)  # (2, HW)

    kernel = _make_fusion_conv_kernel(H, W, RB, PAD)

    out2 = pl.pallas_call(
        kernel,
        out_shape=jax.ShapeDtypeStruct((N * C, HW), ti_nchw.dtype),
        grid_spec=pltpu.PrefetchScalarGridSpec(
            num_scalar_prefetch=0,
            grid=(NB,),
            in_specs=[
                pl.BlockSpec((RB, HW), lambda i: (i, 0)),
                pl.BlockSpec((RB, HW), lambda i: (i, 0)),
                pl.BlockSpec((9, RB, RB), lambda i: (0, 0, 0)),
                pl.BlockSpec((RB, 1), lambda i: (0, 0)),
                pl.BlockSpec((2, HW), lambda i: (0, 0)),
            ],
            out_specs=pl.BlockSpec((RB, HW), lambda i: (i, 0)),
            scratch_shapes=[pltpu.VMEM((RB, EXT), jnp.float32)],
        ),
        compiler_params=pltpu.CompilerParams(
            dimension_semantics=("parallel",)),
    )(ti2, ci2, wbd, b2, masks)

    return out2.reshape(N, C, H, W)


def _reference(ti_nchw, ci_nchw, weight_oihw, bias):
    """Pure-JAX reference (lax conv) for correctness checking."""
    x = ti_nchw * ci_nchw
    out = jax.lax.conv_general_dilated(
        x, weight_oihw,
        window_strides=(1, 1), padding="SAME",
        dimension_numbers=("NCHW", "OIHW", "NCHW"))
    return out + bias.reshape(1, -1, 1, 1)


if __name__ == "__main__":
    # Small shapes consistent with the module: batch=2, channels=4, spatial=16.
    N, C, H, W = 2, 4, 16, 16

    key = jax.random.PRNGKey(0)
    k_ti, k_ci, k_w, k_b = jax.random.split(key, 4)

    ti = jax.random.normal(k_ti, (N, C, H, W), dtype=jnp.float32)
    ci = jax.random.normal(k_ci, (N, C, H, W), dtype=jnp.float32)

    # Deterministic parameter init mimicking nn.Conv2d default (uniform +/- 1/sqrt(fan_in)).
    fan_in = C * 3 * 3
    bound = 1.0 / jnp.sqrt(jnp.float32(fan_in))
    weight = jax.random.uniform(k_w, (C, C, 3, 3), jnp.float32, -bound, bound)
    bias = jax.random.uniform(k_b, (C,), jnp.float32, -bound, bound)

    out = jax.block_until_ready(multimodal_fusion(ti, ci, weight, bias))
    ref = jax.block_until_ready(_reference(ti, ci, weight, bias))

    assert out.shape == (N, C, H, W)
    assert jnp.max(jnp.abs(out - ref)) < 1e-4, "mismatch vs reference conv"

    print("KERNEL_OK")
</pallas_src>

<mosaic_0001>
module attributes {stable_mosaic.version = 11 : i64} {
  func.func @kernel(%arg0: i32, %arg1: memref<8x256xf32, #tpu.memory_space<vmem>>, %arg2: memref<8x256xf32, #tpu.memory_space<vmem>>, %arg3: memref<9x8x8xf32, #tpu.memory_space<vmem>>, %arg4: memref<8x1xf32, #tpu.memory_space<vmem>>, %arg5: memref<2x256xf32, #tpu.memory_space<vmem>>, %arg6: memref<8x256xf32, #tpu.memory_space<vmem>>, %arg7: memref<8x512xf32, #tpu.memory_space<vmem>>) attributes {dimension_semantics = [#tpu.dimension_semantics<parallel>], iteration_bounds = array<i64: 1>, scalar_prefetch = 0 : i64, scratch_operands = 1 : i64, tpu.core_type = #tpu.core_type<tc>, window_params = [{transform_indices = @transform_0, window_bounds = array<i64: 8, 256>}, {transform_indices = @transform_1, window_bounds = array<i64: 8, 256>}, {pipeline_mode = #tpu.pipeline_mode<synchronous>, transform_indices = @transform_2, window_bounds = array<i64: 9, 8, 8>}, {pipeline_mode = #tpu.pipeline_mode<synchronous>, transform_indices = @transform_3, window_bounds = array<i64: 8, 1>}, {pipeline_mode = #tpu.pipeline_mode<synchronous>, transform_indices = @transform_4, window_bounds = array<i64: 2, 256>}, {transform_indices = @transform_5, window_bounds = array<i64: 8, 256>}]} {
    %c0 = arith.constant 0 : index
    %c0_0 = arith.constant 0 : index
    %0 = vector.load %arg1[%c0, %c0_0] : memref<8x256xf32, #tpu.memory_space<vmem>>, vector<8x256xf32>
    %c0_1 = arith.constant 0 : index
    %c0_2 = arith.constant 0 : index
    %1 = vector.load %arg2[%c0_1, %c0_2] : memref<8x256xf32, #tpu.memory_space<vmem>>, vector<8x256xf32>
    %2 = arith.mulf %0, %1 : vector<8x256xf32>
    %cst = arith.constant 0.000000e+00 : f32
    %3 = vector.broadcast %cst : f32 to vector<8x128xf32>
    %c0_3 = arith.constant 0 : index
    %c0_4 = arith.constant 0 : index
    %4 = vector.load %arg7[%c0_3, %c0_4] : memref<8x512xf32, #tpu.memory_space<vmem>>, vector<8x128xf32>
    tpu.vector_store %arg7[%c0_3, %c0_4], %3 {strides = array<i32>} : memref<8x512xf32, #tpu.memory_space<vmem>>, vector<8x128xf32>,
    %cst_5 = arith.constant 0.000000e+00 : f32
    %5 = vector.broadcast %cst_5 : f32 to vector<8x128xf32>
    %c0_6 = arith.constant 0 : index
    %c384 = arith.constant 384 : index
    %6 = vector.load %arg7[%c0_6, %c384] : memref<8x512xf32, #tpu.memory_space<vmem>>, vector<8x128xf32>
    tpu.vector_store %arg7[%c0_6, %c384], %5 {strides = array<i32>} : memref<8x512xf32, #tpu.memory_space<vmem>>, vector<8x128xf32>,
    %c0_7 = arith.constant 0 : index
    %c128 = arith.constant 128 : index
    %7 = vector.load %arg7[%c0_7, %c128] : memref<8x512xf32, #tpu.memory_space<vmem>>, vector<8x256xf32>
    tpu.vector_store %arg7[%c0_7, %c128], %2 {strides = array<i32>} : memref<8x512xf32, #tpu.memory_space<vmem>>, vector<8x256xf32>,
    %c0_8 = arith.constant 0 : index
    %c0_9 = arith.constant 0 : index
    %8 = vector.load %arg5[%c0_8, %c0_9] : memref<2x256xf32, #tpu.memory_space<vmem>>, vector<1x256xf32>
    %cst_10 = arith.constant 0.000000e+00 : f32
    %9 = vector.broadcast %cst_10 : f32 to vector<1x256xf32>
    %10 = arith.cmpf one, %8, %9 : vector<1x256xf32>
    %11 = vector.shape_cast %10 : vector<1x256xi1> to vector<1x256xi1>
    %12 = vector.broadcast %11 : vector<1x256xi1> to vector<8x256xi1>
    %c1 = arith.constant 1 : index
    %c0_11 = arith.constant 0 : index
    %13 = vector.load %arg5[%c1, %c0_11] : memref<2x256xf32, #tpu.memory_space<vmem>>, vector<1x256xf32>
    %cst_12 = arith.constant 0.000000e+00 : f32
    %14 = vector.broadcast %cst_12 : f32 to vector<1x256xf32>
    %15 = arith.cmpf one, %13, %14 : vector<1x256xf32>
    %16 = vector.shape_cast %15 : vector<1x256xi1> to vector<1x256xi1>
    %17 = vector.broadcast %16 : vector<1x256xi1> to vector<8x256xi1>
    %cst_13 = arith.constant 0.000000e+00 : f32
    %18 = vector.broadcast %cst_13 : f32 to vector<8x256xf32>
    %c0_14 = arith.constant 0 : index
    %c0_15 = arith.constant 0 : index
    %19 = vector.load %arg4[%c0_14, %c0_15] : memref<8x1xf32, #tpu.memory_space<vmem>>, vector<8x1xf32>
    %20 = vector.shape_cast %19 : vector<8x1xf32> to vector<8x1xf32>
    %21 = vector.broadcast %20 : vector<8x1xf32> to vector<8x256xf32>
    %c0_16 = arith.constant 0 : index
    %c111 = arith.constant 111 : index
    %22 = vector.load %arg7[%c0_16, %c111] : memref<8x512xf32, #tpu.memory_space<vmem>>, vector<8x256xf32>
    %23 = arith.select %12, %22, %18 : vector<8x256xi1>, vector<8x256xf32>
    %c0_17 = arith.constant 0 : index
    %c0_18 = arith.constant 0 : index
    %c0_19 = arith.constant 0 : index
    %24 = vector.load %arg3[%c0_17, %c0_18, %c0_19] : memref<9x8x8xf32, #tpu.memory_space<vmem>>, vector<1x8x8xf32>
    %25 = vector.shape_cast %24 : vector<1x8x8xf32> to vector<8x8xf32>
    %cst_20 = arith.constant dense<0.000000e+00> : vector<8x256xf32>
    %26 = tpu.matmul %25, %23, %cst_20 {dimension_numbers = #tpu.dot_dimension_numbers<[1], [0], [0], [1], [0, 0, 1, 1], [], []>} : vector<8x8xf32>, vector<8x256xf32>, vector<8x256xf32> -> vector<8x256xf32>
    %27 = arith.addf %21, %26 : vector<8x256xf32>
    %c0_21 = arith.constant 0 : index
    %c112 = arith.constant 112 : index
    %28 = vector.load %arg7[%c0_21, %c112] : memref<8x512xf32, #tpu.memory_space<vmem>>, vector<8x256xf32>
    %c1_22 = arith.constant 1 : index
    %c0_23 = arith.constant 0 : index
    %c0_24 = arith.constant 0 : index
    %29 = vector.load %arg3[%c1_22, %c0_23, %c0_24] : memref<9x8x8xf32, #tpu.memory_space<vmem>>, vector<1x8x8xf32>
    %30 = vector.shape_cast %29 : vector<1x8x8xf32> to vector<8x8xf32>
    %cst_25 = arith.constant dense<0.000000e+00> : vector<8x256xf32>
    %31 = tpu.matmul %30, %28, %cst_25 {dimension_numbers = #tpu.dot_dimension_numbers<[1], [0], [0], [1], [0, 0, 1, 1], [], []>} : vector<8x8xf32>, vector<8x256xf32>, vector<8x256xf32> -> vector<8x256xf32>
    %32 = arith.addf %27, %31 : vector<8x256xf32>
    %c0_26 = arith.constant 0 : index
    %c113 = arith.constant 113 : index
    %33 = vector.load %arg7[%c0_26, %c113] : memref<8x512xf32, #tpu.memory_space<vmem>>, vector<8x256xf32>
    %34 = arith.select %17, %33, %18 : vector<8x256xi1>, vector<8x256xf32>
    %c2 = arith.constant 2 : index
    %c0_27 = arith.constant 0 : index
    %c0_28 = arith.constant 0 : index
    %35 = vector.load %arg3[%c2, %c0_27, %c0_28] : memref<9x8x8xf32, #tpu.memory_space<vmem>>, vector<1x8x8xf32>
    %36 = vector.shape_cast %35 : vector<1x8x8xf32> to vector<8x8xf32>
    %cst_29 = arith.constant dense<0.000000e+00> : vector<8x256xf32>
    %37 = tpu.matmul %36, %34, %cst_29 {dimension_numbers = #tpu.dot_dimension_numbers<[1], [0], [0], [1], [0, 0, 1, 1], [], []>} : vector<8x8xf32>, vector<8x256xf32>, vector<8x256xf32> -> vector<8x256xf32>
    %38 = arith.addf %32, %37 : vector<8x256xf32>
    %c0_30 = arith.constant 0 : index
    %c127 = arith.constant 127 : index
    %39 = vector.load %arg7[%c0_30, %c127] : memref<8x512xf32, #tpu.memory_space<vmem>>, vector<8x256xf32>
    %40 = arith.select %12, %39, %18 : vector<8x256xi1>, vector<8x256xf32>
    %c3 = arith.constant 3 : index
    %c0_31 = arith.constant 0 : index
    %c0_32 = arith.constant 0 : index
    %41 = vector.load %arg3[%c3, %c0_31, %c0_32] : memref<9x8x8xf32, #tpu.memory_space<vmem>>, vector<1x8x8xf32>
    %42 = vector.shape_cast %41 : vector<1x8x8xf32> to vector<8x8xf32>
    %cst_33 = arith.constant dense<0.000000e+00> : vector<8x256xf32>
    %43 = tpu.matmul %42, %40, %cst_33 {dimension_numbers = #tpu.dot_dimension_numbers<[1], [0], [0], [1], [0, 0, 1, 1], [], []>} : vector<8x8xf32>, vector<8x256xf32>, vector<8x256xf32> -> vector<8x256xf32>
    %44 = arith.addf %38, %43 : vector<8x256xf32>
    %c0_34 = arith.constant 0 : index
    %c128_35 = arith.constant 128 : index
    %45 = vector.load %arg7[%c0_34, %c128_35] : memref<8x512xf32, #tpu.memory_space<vmem>>, vector<8x256xf32>
    %c4 = arith.constant 4 : index
    %c0_36 = arith.constant 0 : index
    %c0_37 = arith.constant 0 : index
    %46 = vector.load %arg3[%c4, %c0_36, %c0_37] : memref<9x8x8xf32, #tpu.memory_space<vmem>>, vector<1x8x8xf32>
    %47 = vector.shape_cast %46 : vector<1x8x8xf32> to vector<8x8xf32>
    %cst_38 = arith.constant dense<0.000000e+00> : vector<8x256xf32>
    %48 = tpu.matmul %47, %45, %cst_38 {dimension_numbers = #tpu.dot_dimension_numbers<[1], [0], [0], [1], [0, 0, 1, 1], [], []>} : vector<8x8xf32>, vector<8x256xf32>, vector<8x256xf32> -> vector<8x256xf32>
    %49 = arith.addf %44, %48 : vector<8x256xf32>
    %c0_39 = arith.constant 0 : index
    %c129 = arith.constant 129 : index
    %50 = vector.load %arg7[%c0_39, %c129] : memref<8x512xf32, #tpu.memory_space<vmem>>, vector<8x256xf32>
    %51 = arith.select %17, %50, %18 : vector<8x256xi1>, vector<8x256xf32>
    %c5 = arith.constant 5 : index
    %c0_40 = arith.constant 0 : index
    %c0_41 = arith.constant 0 : index
    %52 = vector.load %arg3[%c5, %c0_40, %c0_41] : memref<9x8x8xf32, #tpu.memory_space<vmem>>, vector<1x8x8xf32>
    %53 = vector.shape_cast %52 : vector<1x8x8xf32> to vector<8x8xf32>
    %cst_42 = arith.constant dense<0.000000e+00> : vector<8x256xf32>
    %54 = tpu.matmul %53, %51, %cst_42 {dimension_numbers = #tpu.dot_dimension_numbers<[1], [0], [0], [1], [0, 0, 1, 1], [], []>} : vector<8x8xf32>, vector<8x256xf32>, vector<8x256xf32> -> vector<8x256xf32>
    %55 = arith.addf %49, %54 : vector<8x256xf32>
    %c0_43 = arith.constant 0 : index
    %c143 = arith.constant 143 : index
    %56 = vector.load %arg7[%c0_43, %c143] : memref<8x512xf32, #tpu.memory_space<vmem>>, vector<8x256xf32>
    %57 = arith.select %12, %56, %18 : vector<8x256xi1>, vector<8x256xf32>
    %c6 = arith.constant 6 : index
    %c0_44 = arith.constant 0 : index
    %c0_45 = arith.constant 0 : index
    %58 = vector.load %arg3[%c6, %c0_44, %c0_45] : memref<9x8x8xf32, #tpu.memory_space<vmem>>, vector<1x8x8xf32>
    %59 = vector.shape_cast %58 : vector<1x8x8xf32> to vector<8x8xf32>
    %cst_46 = arith.constant dense<0.000000e+00> : vector<8x256xf32>
    %60 = tpu.matmul %59, %57, %cst_46 {dimension_numbers = #tpu.dot_dimension_numbers<[1], [0], [0], [1], [0, 0, 1, 1], [], []>} : vector<8x8xf32>, vector<8x256xf32>, vector<8x256xf32> -> vector<8x256xf32>
    %61 = arith.addf %55, %60 : vector<8x256xf32>
    %c0_47 = arith.constant 0 : index
    %c144 = arith.constant 144 : index
    %62 = vector.load %arg7[%c0_47, %c144] : memref<8x512xf32, #tpu.memory_space<vmem>>, vector<8x256xf32>
    %c7 = arith.constant 7 : index
    %c0_48 = arith.constant 0 : index
    %c0_49 = arith.constant 0 : index
    %63 = vector.load %arg3[%c7, %c0_48, %c0_49] : memref<9x8x8xf32, #tpu.memory_space<vmem>>, vector<1x8x8xf32>
    %64 = vector.shape_cast %63 : vector<1x8x8xf32> to vector<8x8xf32>
    %cst_50 = arith.constant dense<0.000000e+00> : vector<8x256xf32>
    %65 = tpu.matmul %64, %62, %cst_50 {dimension_numbers = #tpu.dot_dimension_numbers<[1], [0], [0], [1], [0, 0, 1, 1], [], []>} : vector<8x8xf32>, vector<8x256xf32>, vector<8x256xf32> -> vector<8x256xf32>
    %66 = arith.addf %61, %65 : vector<8x256xf32>
    %c0_51 = arith.constant 0 : index
    %c145 = arith.constant 145 : index
    %67 = vector.load %arg7[%c0_51, %c145] : memref<8x512xf32, #tpu.memory_space<vmem>>, vector<8x256xf32>
    %68 = arith.select %17, %67, %18 : vector<8x256xi1>, vector<8x256xf32>
    %c8 = arith.constant 8 : index
    %c0_52 = arith.constant 0 : index
    %c0_53 = arith.constant 0 : index
    %69 = vector.load %arg3[%c8, %c0_52, %c0_53] : memref<9x8x8xf32, #tpu.memory_space<vmem>>, vector<1x8x8xf32>
    %70 = vector.shape_cast %69 : vector<1x8x8xf32> to vector<8x8xf32>
    %cst_54 = arith.constant dense<0.000000e+00> : vector<8x256xf32>
    %71 = tpu.matmul %70, %68, %cst_54 {dimension_numbers = #tpu.dot_dimension_numbers<[1], [0], [0], [1], [0, 0, 1, 1], [], []>} : vector<8x8xf32>, vector<8x256xf32>, vector<8x256xf32> -> vector<8x256xf32>
    %72 = arith.addf %66, %71 : vector<8x256xf32>
    %c0_55 = arith.constant 0 : index
    %c0_56 = arith.constant 0 : index
    %73 = vector.load %arg6[%c0_55, %c0_56] : memref<8x256xf32, #tpu.memory_space<vmem>>, vector<8x256xf32>
    tpu.vector_store %arg6[%c0_55, %c0_56], %72 {strides = array<i32>} : memref<8x256xf32, #tpu.memory_space<vmem>>, vector<8x256xf32>,
    return
  }
  func.func @transform_0(%arg0: i32) -> (i32, i32) {
    %c0_i32 = arith.constant 0 : i32
    %c0_i32_0 = arith.constant 0 : i32
    return %arg0, %c0_i32 : i32, i32
  }
  func.func @transform_1(%arg0: i32) -> (i32, i32) {
    %c0_i32 = arith.constant 0 : i32
    %c0_i32_0 = arith.constant 0 : i32
    return %arg0, %c0_i32 : i32, i32
  }
  func.func @transform_2(%arg0: i32) -> (i32, i32, i32) {
    %c0_i32 = arith.constant 0 : i32
    %c0_i32_0 = arith.constant 0 : i32
    %c0_i32_1 = arith.constant 0 : i32
    %c0_i32_2 = arith.constant 0 : i32
    return %c0_i32, %c0_i32_0, %c0_i32_1 : i32, i32, i32
  }
  func.func @transform_3(%arg0: i32) -> (i32, i32) {
    %c0_i32 = arith.constant 0 : i32
    %c0_i32_0 = arith.constant 0 : i32
    %c0_i32_1 = arith.constant 0 : i32
    return %c0_i32, %c0_i32_0 : i32, i32
  }
  func.func @transform_4(%arg0: i32) -> (i32, i32) {
    %c0_i32 = arith.constant 0 : i32
    %c0_i32_0 = arith.constant 0 : i32
    %c0_i32_1 = arith.constant 0 : i32
    return %c0_i32, %c0_i32_0 : i32, i32
  }
  func.func @transform_5(%arg0: i32) -> (i32, i32) {
    %c0_i32 = arith.constant 0 : i32
    %c0_i32_0 = arith.constant 0 : i32
    return %arg0, %c0_i32 : i32, i32
  }
}

</mosaic_0001>

<llo_original>
// kernel: tile.8
$region0: #{tile.8}
  #allocation0 [shape = 's32[1]{0}', space=sflag, size = 0x4, scoped, tag = 'scoped memory for tile.8']
  %s0 = inlined_call_operand.vmem [shape: f32[4], index: 0, kind: input, shape index: {}]
  %s1 = inlined_call_operand.vmem [shape: f32[2,4], index: 1, kind: output, shape index: {}]
  // Predicated region
  $region2: #{tile.8} parent=0 // pred_check
    _
  $region3: #{tile.8} parent=0 // pred_check_branch
    %3 = sbr.rel (0) target = $region5
  $region4: #{tile.8} parent=0 // pred_region
    _
  $region5: #{tile.8} parent=0 // pred_fallthru
    _
  %v4 = vld [vmem:[%s0] ss:$0 sm:$0xff]
  %5 = vst [vmem:[%s1] sm:$0x3] %v4

// kernel: tile.0
$region0: #{tile.0}
  %s0 = inlined_call_operand.vmem [shape: f32[2,4], index: 0, kind: input, shape index: {}]
  %s1 = inlined_call_operand.vmem [shape: f32[8,1], index: 1, kind: output, shape index: {}]
  $region1: #{tile.0} parent=0
    #allocation0 [shape = 'u8[4096]{0}', space=vmem, size = 0x1000, scoped, tag = 'scoped mem for input reshape']
    %s3 = sshll.u32 1, 2
    %s4 = ssub.s32 %s3, 1
    %v5 = vld [vmem:[%s0] sm:%s4]
    %6 = vst [vmem:[#allocation0] sm:%s4] %v5
    %v7 = vld [vmem:[#allocation0] sm:$0x3]
    %vm8 = vcmask 7168
    %9 = vst.msk [vmem:[%s1] ss:$4 sm:$0x3] %vm8, %v7
    %v10 = vld [vmem:[#allocation0] sm:$0x3]
    %11 = vrot.lane.b32.xlu0 %v10, 127
    %v12 = vpop.permute.xlu0 %11
    %vm13 = vcmask 7168
    %s14 = scalar_lea.vmem %s1, 1
    %15 = vst.msk [vmem:[%s14] ss:$4 sm:$0x3] %vm13, %v12
    %v16 = vld [vmem:[#allocation0] sm:$0x3]
    %17 = vrot.lane.b32.xlu0 %v16, 126
    %v18 = vpop.permute.xlu0 %17
    %vm19 = vcmask 7168
    %s20 = scalar_lea.vmem %s1, 2
    %21 = vst.msk [vmem:[%s20] ss:$4 sm:$0x3] %vm19, %v18
    %v22 = vld [vmem:[#allocation0] sm:$0x3]
    %23 = vrot.lane.b32.xlu0 %v22, 125
    %v24 = vpop.permute.xlu0 %23
    %vm25 = vcmask 7168
    %s26 = scalar_lea.vmem %s1, 3
    %27 = vst.msk [vmem:[%s26] ss:$4 sm:$0x3] %vm25, %v24

</llo_original>
